<compile_context>
chip_gen: v5e
topology: v5e:2x2
jax: 0.10.0
libtpu: 0.0.40
codegen_flags: <defaults>
</compile_context>

<pallas_src>
import functools

import jax
import jax.numpy as jnp
from jax.experimental import pallas as pl
from jax.experimental.pallas import tpu as pltpu


def _round_up(a, m):
    return ((a + m - 1) // m) * m


def _efl_kernel(x_ref, t_ref, ff_ref, wf_ref, out_ref, *, focal_alpha):
    i = pl.program_id(1)

    @pl.when(i == 0)
    def _():
        out_ref[...] = jnp.zeros_like(out_ref)

    x = x_ref[...]                         # (tile_rows, width) f32
    t = t_ref[...].astype(jnp.float32)     # targets in {0, 1}
    ff = ff_ref[...]                       # (1, width) dynamic gamma
    wf = wf_ref[...]                       # (1, width) gamma weighting

    # Stable BCE-with-logits form (exact for targets in {0, 1}):
    #   pred_t            = sigmoid(z),  z = x * (2t - 1)
    #   ce = -log(pred_t) = softplus(z) - z
    #   (1 - pred_t)^ff   = exp(-ff * softplus(z))
    z = x * (2.0 * t - 1.0)
    sp = jnp.maximum(z, 0.0) + jnp.log(1.0 + jnp.exp(-jnp.abs(z)))
    ce = sp - z
    cls = ce * jnp.exp(-ff * sp) * wf      # (1, width) broadcasts implicitly

    if focal_alpha >= 0:
        # alpha*t + (1-alpha)*(1-t) == (2*alpha - 1)*t + (1 - alpha)
        alpha_t = (2.0 * focal_alpha - 1.0) * t + (1.0 - focal_alpha)
        cls = alpha_t * cls

    # Partial reduction to an (8, width) block using only VPU adds
    # (vreg-aligned static 8-row slices, a few parallel accumulators to keep
    # the dependency chain short and register pressure low).
    tr, w = cls.shape
    n_groups = tr // 8
    n_acc = min(8, n_groups)
    accs = [cls[a * 8:(a + 1) * 8, :] for a in range(n_acc)]
    for g in range(n_acc, n_groups):
        accs[g % n_acc] = accs[g % n_acc] + cls[g * 8:(g + 1) * 8, :]
    partial = accs[0]
    for a in range(1, n_acc):
        partial = partial + accs[a]

    out_ref[...] += partial


def equalized_focal_loss(x, target, pos_neg, *,
                         focal_gamma=2.0, focal_alpha=0.25, scale_factor=8.0,
                         max_tile_rows=4096, tile_bytes_cap=2 << 20,
                         num_core_splits=2):
    bs, nc = x.shape
    fg = float(focal_gamma)
    fa = float(focal_alpha)
    sf = float(scale_factor)

    # ---- lane-dense folding: pack r batch rows into one 128-lane-wide row ----
    if nc < 128 and 128 % nc == 0:
        r = 128 // nc
    else:
        r = 1
    width = nc * r

    # ---- per-class dynamic gamma precomputed once (grid-invariant) ----
    map_val = 1.0 - pos_neg.astype(jnp.float32)
    dy_gamma = fg + sf * map_val                       # (nc,)
    ff_row = jnp.tile(dy_gamma, (r,)).reshape(1, width)
    wf_row = ff_row / fg

    # ---- tile sizing: ~tile_bytes_cap of f32 per input tile, bf16-friendly ----
    rows0 = -(-bs // r)                                # rows after folding
    per_split = -(-rows0 // num_core_splits)
    tile_rows = max(16, min(max_tile_rows, tile_bytes_cap // (width * 4)))
    tile_rows = (tile_rows // 16) * 16                 # bf16 sublane packing
    tile_rows = min(tile_rows, _round_up(per_split, 16))
    rows_per_split = _round_up(per_split, tile_rows)
    rows_pad = rows_per_split * num_core_splits
    steps = rows_per_split // tile_rows
    bs_pad = rows_pad * r

    # ---- pad with rows that contribute exactly 0 (t=0, large-negative logit) ----
    x32 = x.astype(jnp.float32)
    tbf = target.astype(jnp.bfloat16)   # {0,1} exact in bf16; halves HBM traffic
    if bs_pad != bs:
        x32 = jnp.concatenate(
            [x32, jnp.full((bs_pad - bs, nc), -100.0, jnp.float32)], axis=0)
        tbf = jnp.concatenate(
            [tbf, jnp.zeros((bs_pad - bs, nc), jnp.bfloat16)], axis=0)
    x2 = x32.reshape(rows_pad, width)
    t2 = tbf.reshape(rows_pad, width)

    kernel = functools.partial(_efl_kernel, focal_alpha=fa)

    n_elem = rows_pad * width
    cost = pl.CostEstimate(
        flops=15 * n_elem,
        transcendentals=3 * n_elem,
        bytes_accessed=6 * n_elem + 8 * width + 4 * 8 * width * num_core_splits,
    )
    tile_in_bytes = tile_rows * width * (4 + 2)   # x(f32)+t(bf16), one buffer
    vmem_limit = int(min(100 << 20, max(8 << 20, 4 * tile_in_bytes + (2 << 20))))

    partials = pl.pallas_call(
        kernel,
        out_shape=jax.ShapeDtypeStruct((8 * num_core_splits, width), jnp.float32),
        grid_spec=pltpu.PrefetchScalarGridSpec(
            num_scalar_prefetch=0,
            grid=(num_core_splits, steps),
            in_specs=[
                pl.BlockSpec((tile_rows, width), lambda c, i: (c * steps + i, 0)),
                pl.BlockSpec((tile_rows, width), lambda c, i: (c * steps + i, 0)),
                pl.BlockSpec((1, width), lambda c, i: (0, 0)),
                pl.BlockSpec((1, width), lambda c, i: (0, 0)),
            ],
            out_specs=pl.BlockSpec((8, width), lambda c, i: (c, 0)),
        ),
        compiler_params=pltpu.CompilerParams(
            dimension_semantics=("parallel", "arbitrary"),
            vmem_limit_bytes=vmem_limit,
        ),
        cost_estimate=cost,
    )(x2, t2, ff_row, wf_row)

    # One cross-lane reduce, once, outside the kernel.
    return jnp.sum(partials) / bs


def reference_efl(x, target, pos_neg, *,
                  focal_gamma=2.0, focal_alpha=0.25, scale_factor=8.0):
    bs, nc = x.shape
    pred = jax.nn.sigmoid(x)
    pred_t = pred * target + (1 - pred) * (1 - target)
    map_val = 1 - pos_neg
    dy_gamma = focal_gamma + scale_factor * map_val
    ff = jnp.broadcast_to(dy_gamma.reshape(1, -1), (bs, nc))
    wf = ff / focal_gamma
    ce_loss = -jnp.log(pred_t)
    cls_loss = ce_loss * jnp.power(1 - pred_t, ff) * wf
    if focal_alpha >= 0:
        alpha_t = focal_alpha * target + (1 - focal_alpha) * (1 - target)
        cls_loss = alpha_t * cls_loss
    return jnp.sum(cls_loss) / bs


if __name__ == "__main__":
    key = jax.random.PRNGKey(0)
    bs, num_classes = 16, 32

    kx, kt = jax.random.split(key)
    x = jax.random.normal(kx, (bs, num_classes), dtype=jnp.float32)
    # multi-label targets in {0, 1}
    target = (jax.random.uniform(kt, (bs, num_classes)) < 0.1).astype(jnp.float32)

    # Buffer init matching the nn.Module: pos_neg = ones(num_classes).
    pos_neg = jnp.ones((num_classes,), dtype=jnp.float32)
    # TODO(synk): collect_grad / dist.all_reduce buffer updates are training-time
    # state bookkeeping outside the forward pass; not implemented here.

    out = equalized_focal_loss(x, target, pos_neg)
    out = jax.block_until_ready(out)

    ref = reference_efl(x, target, pos_neg)
    assert jnp.allclose(out, ref, rtol=1e-5, atol=1e-5), (out, ref)

    print("KERNEL_OK")
</pallas_src>

<mosaic_0001>
module attributes {stable_mosaic.version = 11 : i64} {
  func.func @_efl_kernel(%arg0: i32, %arg1: i32, %arg2: memref<16x128xf32, #tpu.memory_space<vmem>>, %arg3: memref<16x128xbf16, #tpu.memory_space<vmem>>, %arg4: memref<1x128xf32, #tpu.memory_space<vmem>>, %arg5: memref<1x128xf32, #tpu.memory_space<vmem>>, %arg6: memref<8x128xf32, #tpu.memory_space<vmem>>) attributes {dimension_semantics = [#tpu.dimension_semantics<parallel>, #tpu.dimension_semantics<arbitrary>], iteration_bounds = array<i64: 2, 1>, scalar_prefetch = 0 : i64, scratch_operands = 0 : i64, tpu.core_type = #tpu.core_type<tc>, window_params = [{transform_indices = @transform_0, window_bounds = array<i64: 16, 128>}, {transform_indices = @transform_1, window_bounds = array<i64: 16, 128>}, {pipeline_mode = #tpu.pipeline_mode<synchronous>, transform_indices = @transform_2, window_bounds = array<i64: 1, 128>}, {pipeline_mode = #tpu.pipeline_mode<synchronous>, transform_indices = @transform_3, window_bounds = array<i64: 1, 128>}, {transform_indices = @transform_4, window_bounds = array<i64: 8, 128>}]} {
    %c0_i32 = arith.constant 0 : i32
    %0 = arith.cmpi eq, %arg1, %c0_i32 : i32
    %1 = arith.extui %0 : i1 to i32
    %c0_i32_0 = arith.constant 0 : i32
    %2 = arith.cmpi ne, %1, %c0_i32_0 : i32
    scf.if %2 {
      %cst_19 = arith.constant 0.000000e+00 : f32
      %43 = vector.broadcast %cst_19 : f32 to vector<8x128xf32>
      %c0_20 = arith.constant 0 : index
      %c0_21 = arith.constant 0 : index
      %44 = vector.load %arg6[%c0_20, %c0_21] : memref<8x128xf32, #tpu.memory_space<vmem>>, vector<8x128xf32>
      tpu.vector_store %arg6[%c0_20, %c0_21], %43 {strides = array<i32>} : memref<8x128xf32, #tpu.memory_space<vmem>>, vector<8x128xf32>,
    } else {
    }
    %c0 = arith.constant 0 : index
    %c0_1 = arith.constant 0 : index
    %3 = vector.load %arg2[%c0, %c0_1] : memref<16x128xf32, #tpu.memory_space<vmem>>, vector<16x128xf32>
    %c0_2 = arith.constant 0 : index
    %c0_3 = arith.constant 0 : index
    %4 = vector.load %arg3[%c0_2, %c0_3] : memref<16x128xbf16, #tpu.memory_space<vmem>>, vector<16x128xbf16>
    %5 = arith.extf %4 : vector<16x128xbf16> to vector<16x128xf32>
    %c0_4 = arith.constant 0 : index
    %c0_5 = arith.constant 0 : index
    %6 = vector.load %arg4[%c0_4, %c0_5] : memref<1x128xf32, #tpu.memory_space<vmem>>, vector<1x128xf32>
    %c0_6 = arith.constant 0 : index
    %c0_7 = arith.constant 0 : index
    %7 = vector.load %arg5[%c0_6, %c0_7] : memref<1x128xf32, #tpu.memory_space<vmem>>, vector<1x128xf32>
    %cst = arith.constant 2.000000e+00 : f32
    %8 = vector.broadcast %cst : f32 to vector<16x128xf32>
    %9 = arith.mulf %8, %5 : vector<16x128xf32>
    %cst_8 = arith.constant 1.000000e+00 : f32
    %10 = vector.broadcast %cst_8 : f32 to vector<16x128xf32>
    %11 = arith.subf %9, %10 : vector<16x128xf32>
    %12 = arith.mulf %3, %11 : vector<16x128xf32>
    %cst_9 = arith.constant 0.000000e+00 : f32
    %13 = vector.broadcast %cst_9 : f32 to vector<16x128xf32>
    %14 = arith.maximumf %12, %13 : vector<16x128xf32>
    %15 = math.absf %12 : vector<16x128xf32>
    %cst_10 = arith.constant 0.000000e+00 : f32
    %16 = vector.broadcast %cst_10 : f32 to vector<16x128xf32>
    %17 = arith.subf %16, %15 : vector<16x128xf32>
    %18 = math.exp %17 : vector<16x128xf32>
    %cst_11 = arith.constant 1.000000e+00 : f32
    %19 = vector.broadcast %cst_11 : f32 to vector<16x128xf32>
    %20 = arith.addf %19, %18 : vector<16x128xf32>
    %21 = math.log %20 : vector<16x128xf32>
    %22 = arith.addf %14, %21 : vector<16x128xf32>
    %23 = arith.subf %22, %12 : vector<16x128xf32>
    %cst_12 = arith.constant 0.000000e+00 : f32
    %24 = vector.broadcast %cst_12 : f32 to vector<1x128xf32>
    %25 = arith.subf %24, %6 : vector<1x128xf32>
    %26 = vector.broadcast %25 : vector<1x128xf32> to vector<16x128xf32>
    %27 = arith.mulf %26, %22 : vector<16x128xf32>
    %28 = math.exp %27 : vector<16x128xf32>
    %29 = arith.mulf %23, %28 : vector<16x128xf32>
    %30 = vector.broadcast %7 : vector<1x128xf32> to vector<16x128xf32>
    %31 = arith.mulf %29, %30 : vector<16x128xf32>
    %cst_13 = arith.constant -5.000000e-01 : f32
    %32 = vector.broadcast %cst_13 : f32 to vector<16x128xf32>
    %33 = arith.mulf %32, %5 : vector<16x128xf32>
    %cst_14 = arith.constant 7.500000e-01 : f32
    %34 = vector.broadcast %cst_14 : f32 to vector<16x128xf32>
    %35 = arith.addf %33, %34 : vector<16x128xf32>
    %36 = arith.mulf %35, %31 : vector<16x128xf32>
    %37 = vector.extract_strided_slice %36 {offsets = [0, 0], sizes = [8, 128], strides = [1, 1]} : vector<16x128xf32> to vector<8x128xf32>
    %38 = vector.extract_strided_slice %36 {offsets = [8, 0], sizes = [8, 128], strides = [1, 1]} : vector<16x128xf32> to vector<8x128xf32>
    %39 = arith.addf %37, %38 : vector<8x128xf32>
    %c0_15 = arith.constant 0 : index
    %c0_16 = arith.constant 0 : index
    %40 = vector.load %arg6[%c0_15, %c0_16] : memref<8x128xf32, #tpu.memory_space<vmem>>, vector<8x128xf32>
    %41 = arith.addf %40, %39 : vector<8x128xf32>
    %c0_17 = arith.constant 0 : index
    %c0_18 = arith.constant 0 : index
    %42 = vector.load %arg6[%c0_17, %c0_18] : memref<8x128xf32, #tpu.memory_space<vmem>>, vector<8x128xf32>
    tpu.vector_store %arg6[%c0_17, %c0_18], %41 {strides = array<i32>} : memref<8x128xf32, #tpu.memory_space<vmem>>, vector<8x128xf32>,
    return
  }
  func.func @transform_0(%arg0: i32, %arg1: i32) -> (i32, i32) {
    %c1_i32 = arith.constant 1 : i32
    %0 = arith.muli %arg0, %c1_i32 : i32
    %1 = arith.addi %0, %arg1 : i32
    %c0_i32 = arith.constant 0 : i32
    %c0_i32_0 = arith.constant 0 : i32
    return %1, %c0_i32 : i32, i32
  }
  func.func @transform_1(%arg0: i32, %arg1: i32) -> (i32, i32) {
    %c1_i32 = arith.constant 1 : i32
    %0 = arith.muli %arg0, %c1_i32 : i32
    %1 = arith.addi %0, %arg1 : i32
    %c0_i32 = arith.constant 0 : i32
    %c0_i32_0 = arith.constant 0 : i32
    return %1, %c0_i32 : i32, i32
  }
  func.func @transform_2(%arg0: i32, %arg1: i32) -> (i32, i32) {
    %c0_i32 = arith.constant 0 : i32
    %c0_i32_0 = arith.constant 0 : i32
    %c0_i32_1 = arith.constant 0 : i32
    return %c0_i32, %c0_i32_0 : i32, i32
  }
  func.func @transform_3(%arg0: i32, %arg1: i32) -> (i32, i32) {
    %c0_i32 = arith.constant 0 : i32
    %c0_i32_0 = arith.constant 0 : i32
    %c0_i32_1 = arith.constant 0 : i32
    return %c0_i32, %c0_i32_0 : i32, i32
  }
  func.func @transform_4(%arg0: i32, %arg1: i32) -> (i32, i32) {
    %c0_i32 = arith.constant 0 : i32
    %c0_i32_0 = arith.constant 0 : i32
    return %arg0, %c0_i32 : i32, i32
  }
}

</mosaic_0001>

<llo_original>
// kernel: tpu_custom_call.1
$region0: #{tpu_custom_call.1}
  #allocation0 [shape = 'u32[]', space=smem, size = 0x4, offset = 0x4, fixed_abs, tag = 'smem constant byte address 0x4 - core index']
  #allocation1 [shape = 'u32[72,128]{1,0:T(1,128)}', space=vmem, size = 0x9000, scoped, tag = 'internal scratch']
  %s0 = inlined_call_operand.hbm [shape: f32[32,128], index: 0, kind: input, shape index: {}]
  %s1 = inlined_call_operand.hbm [shape: bf16[32,128], index: 1, kind: input, shape index: {}]
  %s2 = inlined_call_operand.vmem [shape: f32[1,128], index: 2, kind: input, shape index: {}]
  %s3 = inlined_call_operand.vmem [shape: f32[1,128], index: 3, kind: input, shape index: {}]
  %s4 = inlined_call_operand.hbm [shape: f32[16,128], index: 4, kind: output, shape index: {}]
  %s5 = sld [smem:[#allocation0]]
  $region61: #{tpu_custom_call.1} parent=0
    _
  %s7 = ssub.s32 1, %s5
  %s8 = scalar_select 0, %s7, %s5
  $region1: #{tpu_custom_call.1} parent=0
    #allocation2 [shape = 'u8[16384]{0}', space=vmem, size = 0x4000, scoped, tag = 'input window, operand 0']
    #allocation3 [shape = 's32[2]{0}', space=sflag, size = 0x8, scoped, tag = 'scoped memory for tpu_custom_call.1']
    #allocation4 [shape = 's32[2]{0}', space=sflag, size = 0x8, scoped, tag = 'scoped memory for tpu_custom_call.1']
    #allocation5 [shape = 'u8[8192]{0}', space=vmem, size = 0x2000, scoped, tag = 'input window, operand 1']
    #allocation6 [shape = 's32[2]{0}', space=sflag, size = 0x8, scoped, tag = 'scoped memory for tpu_custom_call.1']
    #allocation7 [shape = 'u8[8192]{0}', space=vmem, size = 0x2000, scoped, tag = 'output window, operand 0']
    %9 = vsyncpa [#allocation3], 0
    %s10 = scalar_lea.sflag [#allocation3], 1
    %11 = vsyncpa %s10, 0
    %12 = vsyncpa [#allocation6], 0
    %s13 = scalar_lea.sflag [#allocation6], 1
    %14 = vsyncpa %s13, 0
    %15 = vsyncpa [#allocation4], 0
    %s16 = scalar_lea.sflag [#allocation4], 1
    %17 = vsyncpa %s16, 0
    loop: start=0, step=1, limit=4
    $region2: #{tpu_custom_call.1} parent=1 // loop_pre_header
      _
    $region3: #{tpu_custom_call.1} parent=1 // loop_header
      %s19 = sphi 0, %s23
      %p20 = scmp.ge.s32.totalorder %s19, 4
      %s26 = sphi 0, %s38
      %s27 = sphi 0, %s34
      %s28 = sphi 0, %s26
      %s29 = sphi 0, %s27
      %s30 = sphi 0, %s28
      %s31 = sphi 0, %s29
      %s43 = sphi 0, %s45
      %s46 = sphi 0, %s43
      %s47 = sphi 0, %s46
      %s63 = sphi 0, %s47
      %s71 = sphi 0, %s73
      %s74 = sphi 0, %s71
      %s75 = sphi 0, %s74
      %s91 = sphi 0, %s75
      %s95 = sphi 0, %s95
      %s97 = sphi 0, %s95
      %s98 = sphi 0, %s97
      %s112 = sphi 0, %s98
      %s116 = sphi 0, %s116
      %s118 = sphi 0, %s116
      %s119 = sphi 0, %s118
      %s133 = sphi 0, %s119
      %s139 = sphi 0, %s141
      %s142 = sphi 0, %s139
      %s143 = sphi 0, %s142
      %s159 = sphi 0, %s143
    $region4: #{tpu_custom_call.1} parent=1 // loop_header_branch
      %22 = sbr.rel (%p20) target = $region8
    $region5: #{tpu_custom_call.1} parent=1 // loop_body
      %s24 = ssub.s32 %s19, 1
      %s25 = ssub.s32 %s19, 2
      %s32 = sadd.s32 1, %s27
      %p33 = scmp.ge.s32.totalorder %s32, 1
      %s34 = scalar_select %p33, 0, %s32
      %s35 = sadd.s32 1, %s26
      %s36 = scalar_select %p33, %s35, %s26
      %p37 = scmp.ge.s32.totalorder %s36, 2
      %s38 = scalar_select %p37, 0, %s36
      %s39 = sadd.s32 %s26, %s27
      %s40 = sadd.s32 %s38, %s34
      %s41 = ssub.s32 %s39, %s40
      %p42 = scmp.eq.s32.totalorder %s41, 0
      %s44 = sadd.s32 %s43, 1
      %s45 = scalar_select %p42, %s43, %s44
      %p48 = pneg %p42
      %p49 = scmp.eq.s32.totalorder %s19, 1
      %p50 = por %p48, %p49
      %p51 = scmp.ne.s32.totalorder %s43, %s46
      %p52 = scmp.eq.s32.totalorder %s19, 0
      %p53 = por %p51, %p52
      %p54 = scmp.ne.s32.totalorder %s43, %s46
      %p55 = scmp.eq.s32.totalorder %s24, 1
      %p56 = por %p54, %p55
      %p57 = scmp.ne.s32.totalorder %s46, %s47
      %p58 = scmp.eq.s32.totalorder %s24, 0
      %p59 = por %p57, %p58
      %p60 = scmp.ne.s32.totalorder %s46, %s47
      %p61 = scmp.eq.s32.totalorder %s25, 1
      %p62 = por %p60, %p61
      %p64 = scmp.ne.s32.totalorder %s47, %s63
      %p65 = scmp.eq.s32.totalorder %s25, 0
      %p66 = por %p64, %p65
      %s67 = sadd.s32 %s26, %s27
      %s68 = sadd.s32 %s38, %s34
      %s69 = ssub.s32 %s67, %s68
      %p70 = scmp.eq.s32.totalorder %s69, 0
      %s72 = sadd.s32 %s71, 1
      %s73 = scalar_select %p70, %s71, %s72
      %p76 = pneg %p70
      %p77 = scmp.eq.s32.totalorder %s19, 1
      %p78 = por %p76, %p77
      %p79 = scmp.ne.s32.totalorder %s71, %s74
      %p80 = scmp.eq.s32.totalorder %s19, 0
      %p81 = por %p79, %p80
      %p82 = scmp.ne.s32.totalorder %s71, %s74
      %p83 = scmp.eq.s32.totalorder %s24, 1
      %p84 = por %p82, %p83
      %p85 = scmp.ne.s32.totalorder %s74, %s75
      %p86 = scmp.eq.s32.totalorder %s24, 0
      %p87 = por %p85, %p86
      %p88 = scmp.ne.s32.totalorder %s74, %s75
      %p89 = scmp.eq.s32.totalorder %s25, 1
      %p90 = por %p88, %p89
      %p92 = scmp.ne.s32.totalorder %s75, %s91
      %p93 = scmp.eq.s32.totalorder %s25, 0
      %p94 = por %p92, %p93
      %s96 = sadd.s32 %s95, 1
      %p99 = scmp.eq.s32.totalorder %s19, 1
      %p100 = scmp.ne.s32.totalorder %s95, %s97
      %p101 = scmp.eq.s32.totalorder %s19, 0
      %p102 = por %p100, %p101
      %p103 = scmp.ne.s32.totalorder %s95, %s97
      %p104 = scmp.eq.s32.totalorder %s24, 1
      %p105 = por %p103, %p104
      %p106 = scmp.ne.s32.totalorder %s97, %s98
      %p107 = scmp.eq.s32.totalorder %s24, 0
      %p108 = por %p106, %p107
      %p109 = scmp.ne.s32.totalorder %s97, %s98
      %p110 = scmp.eq.s32.totalorder %s25, 1
      %p111 = por %p109, %p110
      %p113 = scmp.ne.s32.totalorder %s98, %s112
      %p114 = scmp.eq.s32.totalorder %s25, 0
      %p115 = por %p113, %p114
      %s117 = sadd.s32 %s116, 1
      %p120 = scmp.eq.s32.totalorder %s19, 1
      %p121 = scmp.ne.s32.totalorder %s116, %s118
      %p122 = scmp.eq.s32.totalorder %s19, 0
      %p123 = por %p121, %p122
      %p124 = scmp.ne.s32.totalorder %s116, %s118
      %p125 = scmp.eq.s32.totalorder %s24, 1
      %p126 = por %p124, %p125
      %p127 = scmp.ne.s32.totalorder %s118, %s119
      %p128 = scmp.eq.s32.totalorder %s24, 0
      %p129 = por %p127, %p128
      %p130 = scmp.ne.s32.totalorder %s118, %s119
      %p131 = scmp.eq.s32.totalorder %s25, 1
      %p132 = por %p130, %p131
      %p134 = scmp.ne.s32.totalorder %s119, %s133
      %p135 = scmp.eq.s32.totalorder %s25, 0
      %p136 = por %p134, %p135
      %s137 = ssub.s32 %s26, %s38
      %p138 = scmp.eq.s32.totalorder %s137, 0
      %s140 = sadd.s32 %s139, 1
      %s141 = scalar_select %p138, %s139, %s140
      %p144 = pneg %p138
      %p145 = scmp.eq.s32.totalorder %s19, 1
      %p146 = por %p144, %p145
      %p147 = scmp.ne.s32.totalorder %s139, %s142
      %p148 = scmp.eq.s32.totalorder %s19, 0
      %p149 = por %p147, %p148
      %p150 = scmp.ne.s32.totalorder %s139, %s142
      %p151 = scmp.eq.s32.totalorder %s24, 1
      %p152 = por %p150, %p151
      %p153 = scmp.ne.s32.totalorder %s142, %s143
      %p154 = scmp.eq.s32.totalorder %s24, 0
      %p155 = por %p153, %p154
      %p156 = scmp.ne.s32.totalorder %s142, %s143
      %p157 = scmp.eq.s32.totalorder %s25, 1
      %p158 = por %p156, %p157
      %p160 = scmp.ne.s32.totalorder %s143, %s159
      %p161 = scmp.eq.s32.totalorder %s25, 0
      %p162 = por %p160, %p161
      %p163 = scmp.le.s32.totalorder 1, %s19
      %p164 = scmp.lt.s32.totalorder %s19, 3
      %p165 = pnand %p163, %p164
      %p166 = pneg %p165
      // Predicated region
      $region9: #{tpu_custom_call.1} parent=5 // pred_check
        _
      $region10: #{tpu_custom_call.1} parent=5 // pred_check_branch
        %168 = sbr.rel (%p165) target = $region12
      $region11: #{tpu_custom_call.1} parent=5 // pred_region
        %s169 = ssub.s32 %s19, 1
        // Predicated region
        $region13: #{tpu_custom_call.1} parent=11 // pred_check
          %p170 = pneg %p108
        $region14: #{tpu_custom_call.1} parent=11 // pred_check_branch
          %172 = sbr.rel (%p170) target = $region16
        $region15: #{tpu_custom_call.1} parent=11 // pred_region
          _
        $region16: #{tpu_custom_call.1} parent=11 // pred_fallthru
          _
        // Predicated region
        $region17: #{tpu_custom_call.1} parent=11 // pred_check
          %p173 = pneg %p129
        $region18: #{tpu_custom_call.1} parent=11 // pred_check_branch
          %175 = sbr.rel (%p173) target = $region20
        $region19: #{tpu_custom_call.1} parent=11 // pred_region
          _
        $region20: #{tpu_custom_call.1} parent=11 // pred_fallthru
          _
      $region12: #{tpu_custom_call.1} parent=5 // pred_fallthru
        _
      %p176 = scmp.lt.s32.totalorder %s19, 2
      // Predicated region
      $region21: #{tpu_custom_call.1} parent=5 // pred_check
        %p177 = pneg %p176
      $region22: #{tpu_custom_call.1} parent=5 // pred_check_branch
        %179 = sbr.rel (%p177) target = $region24
      $region23: #{tpu_custom_call.1} parent=5 // pred_region
        // Predicated region
        $region25: #{tpu_custom_call.1} parent=23 // pred_check
          %p180 = pneg %p53
        $region26: #{tpu_custom_call.1} parent=23 // pred_check_branch
          %182 = sbr.rel (%p180) target = $region28
        $region27: #{tpu_custom_call.1} parent=23 // pred_region
          %s183 = sand.u32 %s43, 1
          %s184 = scalar_lea.sflag [#allocation3], %s183
          %s185 = sand.u32 %s43, 1
          %s186 = smul.addr %s185, 16
          %s187 = scalar_lea.vmem [#allocation2], %s186
          %s188 = sadd.s32 %s26, %s27
          %s189 = smul.u32 2, %s188
          %191 = vsyncadd %s184, 0
          %s192 = smul.addr %s189, 8
          %s193 = scalar_lea.hbm %s0, %s192
          %s194 = sshll.u32 %s193, 4
          %s195 = int_to_ptr.hbm [resolvable:$true] %s194
          %s196 = sshll.u32 %s187, 4
          %s197 = int_to_ptr.vmem [resolvable:$true] %s196
          %202 = dma.hbm_to_vmem [thread:$0]  %s195, 256, %s197, %s184, 128, 128, 8
        $region28: #{tpu_custom_call.1} parent=23 // pred_fallthru
          _
        // Predicated region
        $region29: #{tpu_custom_call.1} parent=23 // pred_check
          %p203 = pneg %p81
        $region30: #{tpu_custom_call.1} parent=23 // pred_check_branch
          %205 = sbr.rel (%p203) target = $region32
        $region31: #{tpu_custom_call.1} parent=23 // pred_region
          %s206 = sand.u32 %s71, 1
          %s207 = scalar_lea.sflag [#allocation6], %s206
          %s208 = sand.u32 %s71, 1
          %s209 = smul.addr %s208, 8
          %s210 = scalar_lea.vmem [#allocation5], %s209
          %s211 = sadd.s32 %s26, %s27
          %s212 = smul.u32 2, %s211
          %214 = vsyncadd %s207, 0
          %s215 = smul.addr %s212, 4
          %s216 = scalar_lea.hbm %s1, %s215
          %s217 = sshll.u32 %s216, 4
          %s218 = int_to_ptr.hbm [resolvable:$true] %s217
          %s219 = sshll.u32 %s210, 4
          %s220 = int_to_ptr.vmem [resolvable:$true] %s219
          %225 = dma.hbm_to_vmem [thread:$0]  %s218, 128, %s220, %s207, 64, 64, 4
        $region32: #{tpu_custom_call.1} parent=23 // pred_fallthru
          _
      $region24: #{tpu_custom_call.1} parent=5 // pred_fallthru
        _
      %p226 = scmp.le.s32.totalorder 1, %s19
      %p227 = scmp.lt.s32.totalorder %s19, 3
      %p228 = pnand %p226, %p227
      %p229 = pneg %p228
      // Predicated region
      $region33: #{tpu_custom_call.1} parent=5 // pred_check
        _
      $region34: #{tpu_custom_call.1} parent=5 // pred_check_branch
        %231 = sbr.rel (%p228) target = $region36
      $region35: #{tpu_custom_call.1} parent=5 // pred_region
        %s232 = ssub.s32 %s19, 1
        %s233 = sand.u32 %s46, 1
        %s234 = scalar_lea.sflag [#allocation3], %s233
        %s235 = sand.u32 %s46, 1
        %s236 = smul.addr %s235, 16
        %s237 = scalar_lea.vmem [#allocation2], %s236
        // Predicated region
        $region37: #{tpu_custom_call.1} parent=35 // pred_check
          %p238 = pneg %p59
        $region38: #{tpu_custom_call.1} parent=35 // pred_check_branch
          %240 = sbr.rel (%p238) target = $region40
        $region39: #{tpu_custom_call.1} parent=35 // pred_region
          %242 = dma.done %s234, 256
        $region40: #{tpu_custom_call.1} parent=35 // pred_fallthru
          _
        %s243 = sand.u32 %s74, 1
        %s244 = scalar_lea.sflag [#allocation6], %s243
        %s245 = sand.u32 %s74, 1
        %s246 = smul.addr %s245, 8
        %s247 = scalar_lea.vmem [#allocation5], %s246
        // Predicated region
        $region41: #{tpu_custom_call.1} parent=35 // pred_check
          %p248 = pneg %p87
        $region42: #{tpu_custom_call.1} parent=35 // pred_check_branch
          %250 = sbr.rel (%p248) target = $region44
        $region43: #{tpu_custom_call.1} parent=35 // pred_region
          %252 = dma.done %s244, 128
        $region44: #{tpu_custom_call.1} parent=35 // pred_fallthru
          _
        %s253 = sand.u32 %s46, 1
        %s254 = scalar_lea.sflag [#allocation3], %s253
        %s255 = sand.u32 %s46, 1
        %s256 = smul.addr %s255, 16
        %s257 = scalar_lea.vmem [#allocation2], %s256
        %p258 = pneg %p59
        %p259 = pneg %p56
        %s260 = sand.u32 %s74, 1
        %s261 = scalar_lea.sflag [#allocation6], %s260
        %s262 = sand.u32 %s74, 1
        %s263 = smul.addr %s262, 8
        %s264 = scalar_lea.vmem [#allocation5], %s263
        %p265 = pneg %p87
        %p266 = pneg %p84
        %p267 = pneg %p108
        %p268 = pneg %p105
        %p269 = pneg %p129
        %p270 = pneg %p126
        %p271 = pneg %p155
        %p272 = pneg %p152
        %s273 = sand.u32 %s142, 1
        %s274 = scalar_lea.sflag [#allocation4], %s273
        %s275 = sand.u32 %s142, 1
        %s276 = smul.addr %s275, 8
        %s277 = scalar_lea.vmem [#allocation7], %s276
        %s278 = sadd.s32 %s28, %s29
        %s279 = smul.u32 2, %s278
        %s280 = sadd.s32 %s28, %s29
        %s281 = smul.u32 2, %s280
        %p282 = scmp.eq.s32.totalorder %s29, 0
        // Predicated region
        $region45: #{tpu_custom_call.1} parent=35 // pred_check
          %p283 = pneg %p282
        $region46: #{tpu_custom_call.1} parent=35 // pred_check_branch
          %285 = sbr.rel (%p283) target = $region48
        $region47: #{tpu_custom_call.1} parent=35 // pred_region
          %286 = vst [vmem:[%s277] sm:$0xff] 0.0
        $region48: #{tpu_custom_call.1} parent=35 // pred_fallthru
          _
        %v287 = vld [vmem:[%s237] sm:$0xff]
        %v288 = vld [vmem:[%s237 + $0x8] sm:$0xff]
        %v289 = vld [vmem:[%s247] sm:$0xf]
        %v290 = vld [vmem:[%s247 + $0x4] sm:$0xf]
        %v291 = vunpack.c.l.bf16 %v289
        %v292 = vunpack.c.l.bf16 %v290
        %v293 = vld [vmem:[%s2] sm:$0x1]
        %v294 = vld [vmem:[%s3] sm:$0x1]
        %v295 = vmul.f32 %v291, 2.0
        %v296 = vmul.f32 %v292, 2.0
        %v297 = vsub.f32 %v295, 1.0
        %v298 = vsub.f32 %v296, 1.0
        %v299 = vmul.f32 %v287, %v297
        %v300 = vmul.f32 %v288, %v298
        %v301 = vmax.f32 %v299, 0.0
        %v302 = vmax.f32 %v300, 0.0
        %v303 = vand.u32 2147483647, %v299
        %v304 = vand.u32 2147483647, %v300
        %v305 = vsub.f32 0.0, %v303
        %v306 = vsub.f32 0.0, %v304
        %v307 = vmul.f32 %v305, 1.442695
        %v308 = vpow.pop %v307
        %v309 = vmul.f32 %v306, 1.442695
        %v310 = vpow.pop %v309
        %v311 = vadd.f32 %v308, 1.0
        %v312 = vadd.f32 %v310, 1.0
        %v313 = vlog2.pop %v311
        %v314 = vmul.f32 %v313, 0.6931472
        %v315 = vlog2.pop %v312
        %v316 = vmul.f32 %v315, 0.6931472
        %v317 = vadd.f32 %v301, %v314
        %v318 = vadd.f32 %v302, %v316
        %v319 = vsub.f32 %v317, %v299
        %v320 = vsub.f32 %v318, %v300
        %v321 = vsub.f32 0.0, %v293
        %v323 = vperm.slane %v321, 0
        %v325 = vmul.f32 %v323, %v317
        %v326 = vmul.f32 %v323, %v318
        %v327 = vmul.f32 %v325, 1.442695
        %v328 = vpow.pop %v327
        %v329 = vmul.f32 %v326, 1.442695
        %v330 = vpow.pop %v329
        %v331 = vmul.f32 %v319, %v328
        %v332 = vmul.f32 %v320, %v330
        %v334 = vperm.slane %v294, 0
        %v336 = vmul.f32 %v331, %v334
        %v337 = vmul.f32 %v332, %v334
        %v338 = vmul.f32 %v291, -0.5
        %v339 = vmul.f32 %v292, -0.5
        %v340 = vadd.f32 %v338, 0.75
        %v341 = vadd.f32 %v339, 0.75
        %v342 = vmul.f32 %v340, %v336
        %v343 = vmul.f32 %v341, %v337
        %v344 = vadd.f32 %v342, %v343
        %v345 = vld [vmem:[%s277] sm:$0xff]
        %v346 = vadd.f32 %v345, %v344
        %347 = vst [vmem:[%s277] sm:$0xff] %v346
        %s348 = sand.u32 %s142, 1
        %s349 = scalar_lea.sflag [#allocation4], %s348
        %s350 = sand.u32 %s142, 1
        %s351 = smul.addr %s350, 8
        %s352 = scalar_lea.vmem [#allocation7], %s351
        // Predicated region
        $region49: #{tpu_custom_call.1} parent=35 // pred_check
          %p353 = pneg %p152
        $region50: #{tpu_custom_call.1} parent=35 // pred_check_branch
          %355 = sbr.rel (%p353) target = $region52
        $region51: #{tpu_custom_call.1} parent=35 // pred_region
          %357 = vsyncadd %s349, 0
          %s358 = smul.addr %s28, 8
          %s359 = scalar_lea.hbm %s4, %s358
          %s361 = sshll.u32 %s352, 4
          %s362 = int_to_ptr.vmem [resolvable:$true] %s361
          %s363 = sshll.u32 %s359, 4
          %s364 = int_to_ptr.hbm [resolvable:$true] %s363
          %366 = dma.vmem_to_hbm [thread:$0]  %s362, 128, %s364, %s349
        $region52: #{tpu_custom_call.1} parent=35 // pred_fallthru
          _
      $region36: #{tpu_custom_call.1} parent=5 // pred_fallthru
        _
      %p367 = scmp.le.s32.totalorder 2, %s19
      // Predicated region
      $region53: #{tpu_custom_call.1} parent=5 // pred_check
        %p368 = pneg %p367
      $region54: #{tpu_custom_call.1} parent=5 // pred_check_branch
        %370 = sbr.rel (%p368) target = $region56
      $region55: #{tpu_custom_call.1} parent=5 // pred_region
        %s371 = ssub.s32 %s19, 2
        // Predicated region
        $region57: #{tpu_custom_call.1} parent=55 // pred_check
          %p372 = pneg %p158
        $region58: #{tpu_custom_call.1} parent=55 // pred_check_branch
          %374 = sbr.rel (%p372) target = $region60
        $region59: #{tpu_custom_call.1} parent=55 // pred_region
          %s375 = sand.u32 %s143, 1
          %s376 = scalar_lea.sflag [#allocation4], %s375
          %s377 = sand.u32 %s143, 1
          %s378 = smul.addr %s377, 8
          %s379 = scalar_lea.vmem [#allocation7], %s378
          %381 = dma.done %s376, 128
        $region60: #{tpu_custom_call.1} parent=55 // pred_fallthru
          _
      $region56: #{tpu_custom_call.1} parent=5 // pred_fallthru
        _
    $region6: #{tpu_custom_call.1} parent=1 // loop_footer
      %s23 = sadd.s32 1, %s19
    $region7: #{tpu_custom_call.1} parent=1 // loop_footer_branch
      %18 = sbr.rel target = $region3
    $region8: #{tpu_custom_call.1} parent=1 // loop_exit
      _
    %382 = vsyncpa [#allocation3], 1
    %s383 = scalar_lea.sflag [#allocation3], 1
    %384 = vsyncpa %s383, 1
    %385 = vsyncpa [#allocation6], 1
    %s386 = scalar_lea.sflag [#allocation6], 1
    %387 = vsyncpa %s386, 1
    %388 = vsyncpa [#allocation4], 1
    %s389 = scalar_lea.sflag [#allocation4], 1
    %390 = vsyncpa %s389, 1

</llo_original>
